<compile_context>
chip_gen: v7x
topology: tpu7x:2x2x1
jax: 0.10.0
libtpu: 0.0.40
codegen_flags: <defaults>
</compile_context>

<pallas_src>
import numpy as np
import jax
import jax.numpy as jnp
from jax.experimental import pallas as pl
from jax.experimental.pallas import tpu as pltpu


def embed_gather_kernel(ids_smem, w_hbm, out_ref, sem):
    """One grid step gathers TN embedding rows via per-row HBM->VMEM DMAs.

    ids_smem: (N_pad,) int32 scalar-prefetched token ids (SMEM)
    w_hbm:    (V, D) embedding table, raw HBM ref (memory_space=pl.ANY)
    out_ref:  (TN, D) output tile (VMEM)
    sem:      (NSLOTS,) DMA semaphores, round-robin over in-flight copies
    """
    i = pl.program_id(0)
    tn, _ = out_ref.shape
    vmax = w_hbm.shape[0] - 1
    nslots = sem.shape[0]
    base = i * tn

    def issue(j):
        tok = ids_smem[base + j]
        # Clamp so an out-of-range id can never read an arbitrary HBM row.
        tok = jnp.minimum(jnp.maximum(tok, 0), vmax)
        pltpu.make_async_copy(
            w_hbm.at[pl.ds(tok, 1), :],        # (1, D) source row in HBM
            out_ref.at[pl.ds(j, 1), :],        # (1, D) destination row in VMEM
            sem.at[j % nslots],
        ).start()

    def drain(j):
        # Only the semaphore and the copy size matter for wait(); every row
        # copy has the same (1, D) shape.
        pltpu.make_async_copy(
            w_hbm.at[pl.ds(0, 1), :],
            out_ref.at[pl.ds(j, 1), :],
            sem.at[j % nslots],
        ).wait()

    # Software pipeline: keep up to `nslots` row DMAs in flight at once.
    for j in range(tn):
        if j >= nslots:
            drain(j - nslots)
        issue(j)
    for j in range(max(0, tn - nslots), tn):
        drain(j)


def _round_up(x, m):
    return (x + m - 1) // m * m


def embedder_forward(ids, weight, *, tn=None, num_dma_slots=16):
    """ids: (B, S) int32, weight: (V, D) f32 -> (B, S, D) f32."""
    B, S = ids.shape
    V, D = weight.shape
    N = B * S
    itemsize = jnp.dtype(weight.dtype).itemsize

    if tn is None:
        # Tokens per grid step: big enough to amortize the ~0.35us/step grid
        # overhead and to give the DMA engine a long in-flight queue, small
        # enough that the double-buffered (TN, D) output tile stays modest
        # in VMEM (256 * 1024 * 4B * 2 = 2 MiB for D=1024).
        tn = min(256, _round_up(N, 8))
    assert tn % 8 == 0, "token tile must be a multiple of 8 (sublane width)"

    # Pad the flattened token stream to a whole number of tiles; padded slots
    # gather row 0 and are sliced off below.
    N_pad = _round_up(N, tn)
    ids_flat = ids.reshape(N).astype(jnp.int32)
    if N_pad != N:
        ids_flat = jnp.concatenate(
            [ids_flat, jnp.zeros((N_pad - N,), jnp.int32)]
        )

    nslots = max(1, min(num_dma_slots, tn))

    out_flat = pl.pallas_call(
        embed_gather_kernel,
        out_shape=jax.ShapeDtypeStruct((N_pad, D), weight.dtype),
        grid_spec=pltpu.PrefetchScalarGridSpec(
            num_scalar_prefetch=1,                 # ids -> SMEM
            grid=(N_pad // tn,),
            in_specs=[
                pl.BlockSpec(memory_space=pl.ANY),  # weight stays in HBM
            ],
            out_specs=pl.BlockSpec((tn, D), lambda i, ids_ref: (i, 0)),
            scratch_shapes=[pltpu.SemaphoreType.DMA((nslots,))],
        ),
        compiler_params=pltpu.CompilerParams(
            # Token tiles are independent -> shard across TCs on v7x megacore.
            dimension_semantics=("parallel",),
        ),
        cost_estimate=pl.CostEstimate(
            flops=0,
            transcendentals=0,
            bytes_accessed=2 * N_pad * D * itemsize + N_pad * 4,
        ),
    )(ids_flat, weight)

    return out_flat[:N].reshape(B, S, D)


def make_embedding_weight(vocab_size, d_model):
    # Matches Embedder2.__init__: np.random.seed(1); uniform(0, 1, (V, D)),
    # stored as a float32 parameter.
    np.random.seed(1)
    w = np.random.uniform(0.0, 1.0, (vocab_size, d_model)).astype(np.float32)
    return jnp.asarray(w)


if __name__ == "__main__":
    # Small shapes consistent with the module. D is a multiple of 128 so the
    # output last dim is lane-dense (unmasked vector stores / clean DMA rows).
    vocab_size = 64
    d_model = 128
    B, S = 2, 8

    weight = make_embedding_weight(vocab_size, d_model)

    key = jax.random.PRNGKey(0)
    ids = jax.random.randint(key, (B, S), 0, vocab_size, dtype=jnp.int32)

    # tn=8 -> grid of 2 steps, exercising the multi-tile path.
    out = embedder_forward(ids, weight, tn=8)
    out = jax.block_until_ready(out)

    # Reference: plain row gather (what F.embedding does with default args).
    ref = jnp.take(weight, ids, axis=0)
    assert out.shape == (B, S, d_model)
    assert out.dtype == jnp.float32
    np.testing.assert_allclose(np.asarray(out), np.asarray(ref), rtol=0, atol=0)

    # Second config: non-divisible token count exercises the pad/slice path
    # and the default tile-size selection.
    ids2 = jax.random.randint(jax.random.PRNGKey(0), (2, 5), 0, vocab_size,
                              dtype=jnp.int32)
    out2 = jax.block_until_ready(embedder_forward(ids2, weight))
    ref2 = jnp.take(weight, ids2, axis=0)
    np.testing.assert_allclose(np.asarray(out2), np.asarray(ref2),
                               rtol=0, atol=0)

    print("KERNEL_OK")
</pallas_src>

<mosaic_0001>
module attributes {stable_mosaic.version = 11 : i64} {
  func.func @embed_gather_kernel(%arg0: i32, %arg1: memref<16xi32, #tpu.memory_space<smem>>, %arg2: memref<64x128xf32, #tpu.memory_space<any>>, %arg3: memref<8x128xf32, #tpu.memory_space<vmem>>, %arg4: memref<8x!tpu.dma_semaphore, #tpu.memory_space<semaphore_mem>>) attributes {dimension_semantics = [#tpu.dimension_semantics<parallel>], iteration_bounds = array<i64: 2>, scalar_prefetch = 1 : i64, scratch_operands = 1 : i64, tpu.core_type = #tpu.core_type<tc>, window_params = [{}, {transform_indices = @transform_1, window_bounds = array<i64: 8, 128>}]} {
    %c8_i32 = arith.constant 8 : i32
    %0 = arith.muli %arg0, %c8_i32 : i32
    %c0_i32 = arith.constant 0 : i32
    %1 = arith.addi %0, %c0_i32 : i32
    %2 = arith.index_cast %1 : i32 to index
    %3 = memref.load %arg1[%2] : memref<16xi32, #tpu.memory_space<smem>>
    %c0_i32_0 = arith.constant 0 : i32
    %4 = arith.maxsi %3, %c0_i32_0 : i32
    %c63_i32 = arith.constant 63 : i32
    %5 = arith.minsi %4, %c63_i32 : i32
    %c0_i32_1 = arith.constant 0 : i32
    %c0_i32_2 = arith.constant 0 : i32
    %6 = tpu.memref_slice %arg2[%5, %c0_i32_2] : memref<64x128xf32, #tpu.memory_space<any>> -> memref<1x128xf32, #tpu.memory_space<any>>
    %c0_i32_3 = arith.constant 0 : i32
    %c0_i32_4 = arith.constant 0 : i32
    %7 = tpu.memref_slice %arg3[%c0_i32_3, %c0_i32_4] : memref<8x128xf32, #tpu.memory_space<vmem>> -> memref<1x128xf32, #tpu.memory_space<vmem>>
    %8 = tpu.memref_slice %arg4[%c0_i32_1] : memref<8x!tpu.dma_semaphore, #tpu.memory_space<semaphore_mem>> -> memref<1x!tpu.dma_semaphore, #tpu.memory_space<semaphore_mem>>
    %9 = tpu.memref_squeeze %8 : memref<1x!tpu.dma_semaphore, #tpu.memory_space<semaphore_mem>> -> memref<!tpu.dma_semaphore, #tpu.memory_space<semaphore_mem>>
    tpu.enqueue_dma source(%6 : memref<1x128xf32, #tpu.memory_space<any>>) target(%7 : memref<1x128xf32, #tpu.memory_space<vmem>>) target_semaphore(%9 : memref<!tpu.dma_semaphore, #tpu.memory_space<semaphore_mem>>)
    %c1_i32 = arith.constant 1 : i32
    %10 = arith.addi %0, %c1_i32 : i32
    %11 = arith.index_cast %10 : i32 to index
    %12 = memref.load %arg1[%11] : memref<16xi32, #tpu.memory_space<smem>>
    %c0_i32_5 = arith.constant 0 : i32
    %13 = arith.maxsi %12, %c0_i32_5 : i32
    %c63_i32_6 = arith.constant 63 : i32
    %14 = arith.minsi %13, %c63_i32_6 : i32
    %c1_i32_7 = arith.constant 1 : i32
    %c0_i32_8 = arith.constant 0 : i32
    %15 = tpu.memref_slice %arg2[%14, %c0_i32_8] : memref<64x128xf32, #tpu.memory_space<any>> -> memref<1x128xf32, #tpu.memory_space<any>>
    %c1_i32_9 = arith.constant 1 : i32
    %c0_i32_10 = arith.constant 0 : i32
    %16 = tpu.memref_slice %arg3[%c1_i32_9, %c0_i32_10] : memref<8x128xf32, #tpu.memory_space<vmem>> -> memref<1x128xf32, #tpu.memory_space<vmem>>
    %17 = tpu.memref_slice %arg4[%c1_i32_7] : memref<8x!tpu.dma_semaphore, #tpu.memory_space<semaphore_mem>> -> memref<1x!tpu.dma_semaphore, #tpu.memory_space<semaphore_mem>>
    %18 = tpu.memref_squeeze %17 : memref<1x!tpu.dma_semaphore, #tpu.memory_space<semaphore_mem>> -> memref<!tpu.dma_semaphore, #tpu.memory_space<semaphore_mem>>
    tpu.enqueue_dma source(%15 : memref<1x128xf32, #tpu.memory_space<any>>) target(%16 : memref<1x128xf32, #tpu.memory_space<vmem>>) target_semaphore(%18 : memref<!tpu.dma_semaphore, #tpu.memory_space<semaphore_mem>>)
    %c2_i32 = arith.constant 2 : i32
    %19 = arith.addi %0, %c2_i32 : i32
    %20 = arith.index_cast %19 : i32 to index
    %21 = memref.load %arg1[%20] : memref<16xi32, #tpu.memory_space<smem>>
    %c0_i32_11 = arith.constant 0 : i32
    %22 = arith.maxsi %21, %c0_i32_11 : i32
    %c63_i32_12 = arith.constant 63 : i32
    %23 = arith.minsi %22, %c63_i32_12 : i32
    %c2_i32_13 = arith.constant 2 : i32
    %c0_i32_14 = arith.constant 0 : i32
    %24 = tpu.memref_slice %arg2[%23, %c0_i32_14] : memref<64x128xf32, #tpu.memory_space<any>> -> memref<1x128xf32, #tpu.memory_space<any>>
    %c2_i32_15 = arith.constant 2 : i32
    %c0_i32_16 = arith.constant 0 : i32
    %25 = tpu.memref_slice %arg3[%c2_i32_15, %c0_i32_16] : memref<8x128xf32, #tpu.memory_space<vmem>> -> memref<1x128xf32, #tpu.memory_space<vmem>>
    %26 = tpu.memref_slice %arg4[%c2_i32_13] : memref<8x!tpu.dma_semaphore, #tpu.memory_space<semaphore_mem>> -> memref<1x!tpu.dma_semaphore, #tpu.memory_space<semaphore_mem>>
    %27 = tpu.memref_squeeze %26 : memref<1x!tpu.dma_semaphore, #tpu.memory_space<semaphore_mem>> -> memref<!tpu.dma_semaphore, #tpu.memory_space<semaphore_mem>>
    tpu.enqueue_dma source(%24 : memref<1x128xf32, #tpu.memory_space<any>>) target(%25 : memref<1x128xf32, #tpu.memory_space<vmem>>) target_semaphore(%27 : memref<!tpu.dma_semaphore, #tpu.memory_space<semaphore_mem>>)
    %c3_i32 = arith.constant 3 : i32
    %28 = arith.addi %0, %c3_i32 : i32
    %29 = arith.index_cast %28 : i32 to index
    %30 = memref.load %arg1[%29] : memref<16xi32, #tpu.memory_space<smem>>
    %c0_i32_17 = arith.constant 0 : i32
    %31 = arith.maxsi %30, %c0_i32_17 : i32
    %c63_i32_18 = arith.constant 63 : i32
    %32 = arith.minsi %31, %c63_i32_18 : i32
    %c3_i32_19 = arith.constant 3 : i32
    %c0_i32_20 = arith.constant 0 : i32
    %33 = tpu.memref_slice %arg2[%32, %c0_i32_20] : memref<64x128xf32, #tpu.memory_space<any>> -> memref<1x128xf32, #tpu.memory_space<any>>
    %c3_i32_21 = arith.constant 3 : i32
    %c0_i32_22 = arith.constant 0 : i32
    %34 = tpu.memref_slice %arg3[%c3_i32_21, %c0_i32_22] : memref<8x128xf32, #tpu.memory_space<vmem>> -> memref<1x128xf32, #tpu.memory_space<vmem>>
    %35 = tpu.memref_slice %arg4[%c3_i32_19] : memref<8x!tpu.dma_semaphore, #tpu.memory_space<semaphore_mem>> -> memref<1x!tpu.dma_semaphore, #tpu.memory_space<semaphore_mem>>
    %36 = tpu.memref_squeeze %35 : memref<1x!tpu.dma_semaphore, #tpu.memory_space<semaphore_mem>> -> memref<!tpu.dma_semaphore, #tpu.memory_space<semaphore_mem>>
    tpu.enqueue_dma source(%33 : memref<1x128xf32, #tpu.memory_space<any>>) target(%34 : memref<1x128xf32, #tpu.memory_space<vmem>>) target_semaphore(%36 : memref<!tpu.dma_semaphore, #tpu.memory_space<semaphore_mem>>)
    %c4_i32 = arith.constant 4 : i32
    %37 = arith.addi %0, %c4_i32 : i32
    %38 = arith.index_cast %37 : i32 to index
    %39 = memref.load %arg1[%38] : memref<16xi32, #tpu.memory_space<smem>>
    %c0_i32_23 = arith.constant 0 : i32
    %40 = arith.maxsi %39, %c0_i32_23 : i32
    %c63_i32_24 = arith.constant 63 : i32
    %41 = arith.minsi %40, %c63_i32_24 : i32
    %c4_i32_25 = arith.constant 4 : i32
    %c0_i32_26 = arith.constant 0 : i32
    %42 = tpu.memref_slice %arg2[%41, %c0_i32_26] : memref<64x128xf32, #tpu.memory_space<any>> -> memref<1x128xf32, #tpu.memory_space<any>>
    %c4_i32_27 = arith.constant 4 : i32
    %c0_i32_28 = arith.constant 0 : i32
    %43 = tpu.memref_slice %arg3[%c4_i32_27, %c0_i32_28] : memref<8x128xf32, #tpu.memory_space<vmem>> -> memref<1x128xf32, #tpu.memory_space<vmem>>
    %44 = tpu.memref_slice %arg4[%c4_i32_25] : memref<8x!tpu.dma_semaphore, #tpu.memory_space<semaphore_mem>> -> memref<1x!tpu.dma_semaphore, #tpu.memory_space<semaphore_mem>>
    %45 = tpu.memref_squeeze %44 : memref<1x!tpu.dma_semaphore, #tpu.memory_space<semaphore_mem>> -> memref<!tpu.dma_semaphore, #tpu.memory_space<semaphore_mem>>
    tpu.enqueue_dma source(%42 : memref<1x128xf32, #tpu.memory_space<any>>) target(%43 : memref<1x128xf32, #tpu.memory_space<vmem>>) target_semaphore(%45 : memref<!tpu.dma_semaphore, #tpu.memory_space<semaphore_mem>>)
    %c5_i32 = arith.constant 5 : i32
    %46 = arith.addi %0, %c5_i32 : i32
    %47 = arith.index_cast %46 : i32 to index
    %48 = memref.load %arg1[%47] : memref<16xi32, #tpu.memory_space<smem>>
    %c0_i32_29 = arith.constant 0 : i32
    %49 = arith.maxsi %48, %c0_i32_29 : i32
    %c63_i32_30 = arith.constant 63 : i32
    %50 = arith.minsi %49, %c63_i32_30 : i32
    %c5_i32_31 = arith.constant 5 : i32
    %c0_i32_32 = arith.constant 0 : i32
    %51 = tpu.memref_slice %arg2[%50, %c0_i32_32] : memref<64x128xf32, #tpu.memory_space<any>> -> memref<1x128xf32, #tpu.memory_space<any>>
    %c5_i32_33 = arith.constant 5 : i32
    %c0_i32_34 = arith.constant 0 : i32
    %52 = tpu.memref_slice %arg3[%c5_i32_33, %c0_i32_34] : memref<8x128xf32, #tpu.memory_space<vmem>> -> memref<1x128xf32, #tpu.memory_space<vmem>>
    %53 = tpu.memref_slice %arg4[%c5_i32_31] : memref<8x!tpu.dma_semaphore, #tpu.memory_space<semaphore_mem>> -> memref<1x!tpu.dma_semaphore, #tpu.memory_space<semaphore_mem>>
    %54 = tpu.memref_squeeze %53 : memref<1x!tpu.dma_semaphore, #tpu.memory_space<semaphore_mem>> -> memref<!tpu.dma_semaphore, #tpu.memory_space<semaphore_mem>>
    tpu.enqueue_dma source(%51 : memref<1x128xf32, #tpu.memory_space<any>>) target(%52 : memref<1x128xf32, #tpu.memory_space<vmem>>) target_semaphore(%54 : memref<!tpu.dma_semaphore, #tpu.memory_space<semaphore_mem>>)
    %c6_i32 = arith.constant 6 : i32
    %55 = arith.addi %0, %c6_i32 : i32
    %56 = arith.index_cast %55 : i32 to index
    %57 = memref.load %arg1[%56] : memref<16xi32, #tpu.memory_space<smem>>
    %c0_i32_35 = arith.constant 0 : i32
    %58 = arith.maxsi %57, %c0_i32_35 : i32
    %c63_i32_36 = arith.constant 63 : i32
    %59 = arith.minsi %58, %c63_i32_36 : i32
    %c6_i32_37 = arith.constant 6 : i32
    %c0_i32_38 = arith.constant 0 : i32
    %60 = tpu.memref_slice %arg2[%59, %c0_i32_38] : memref<64x128xf32, #tpu.memory_space<any>> -> memref<1x128xf32, #tpu.memory_space<any>>
    %c6_i32_39 = arith.constant 6 : i32
    %c0_i32_40 = arith.constant 0 : i32
    %61 = tpu.memref_slice %arg3[%c6_i32_39, %c0_i32_40] : memref<8x128xf32, #tpu.memory_space<vmem>> -> memref<1x128xf32, #tpu.memory_space<vmem>>
    %62 = tpu.memref_slice %arg4[%c6_i32_37] : memref<8x!tpu.dma_semaphore, #tpu.memory_space<semaphore_mem>> -> memref<1x!tpu.dma_semaphore, #tpu.memory_space<semaphore_mem>>
    %63 = tpu.memref_squeeze %62 : memref<1x!tpu.dma_semaphore, #tpu.memory_space<semaphore_mem>> -> memref<!tpu.dma_semaphore, #tpu.memory_space<semaphore_mem>>
    tpu.enqueue_dma source(%60 : memref<1x128xf32, #tpu.memory_space<any>>) target(%61 : memref<1x128xf32, #tpu.memory_space<vmem>>) target_semaphore(%63 : memref<!tpu.dma_semaphore, #tpu.memory_space<semaphore_mem>>)
    %c7_i32 = arith.constant 7 : i32
    %64 = arith.addi %0, %c7_i32 : i32
    %65 = arith.index_cast %64 : i32 to index
    %66 = memref.load %arg1[%65] : memref<16xi32, #tpu.memory_space<smem>>
    %c0_i32_41 = arith.constant 0 : i32
    %67 = arith.maxsi %66, %c0_i32_41 : i32
    %c63_i32_42 = arith.constant 63 : i32
    %68 = arith.minsi %67, %c63_i32_42 : i32
    %c7_i32_43 = arith.constant 7 : i32
    %c0_i32_44 = arith.constant 0 : i32
    %69 = tpu.memref_slice %arg2[%68, %c0_i32_44] : memref<64x128xf32, #tpu.memory_space<any>> -> memref<1x128xf32, #tpu.memory_space<any>>
    %c7_i32_45 = arith.constant 7 : i32
    %c0_i32_46 = arith.constant 0 : i32
    %70 = tpu.memref_slice %arg3[%c7_i32_45, %c0_i32_46] : memref<8x128xf32, #tpu.memory_space<vmem>> -> memref<1x128xf32, #tpu.memory_space<vmem>>
    %71 = tpu.memref_slice %arg4[%c7_i32_43] : memref<8x!tpu.dma_semaphore, #tpu.memory_space<semaphore_mem>> -> memref<1x!tpu.dma_semaphore, #tpu.memory_space<semaphore_mem>>
    %72 = tpu.memref_squeeze %71 : memref<1x!tpu.dma_semaphore, #tpu.memory_space<semaphore_mem>> -> memref<!tpu.dma_semaphore, #tpu.memory_space<semaphore_mem>>
    tpu.enqueue_dma source(%69 : memref<1x128xf32, #tpu.memory_space<any>>) target(%70 : memref<1x128xf32, #tpu.memory_space<vmem>>) target_semaphore(%72 : memref<!tpu.dma_semaphore, #tpu.memory_space<semaphore_mem>>)
    %c0_i32_47 = arith.constant 0 : i32
    %c0_i32_48 = arith.constant 0 : i32
    %c0_i32_49 = arith.constant 0 : i32
    %73 = tpu.memref_slice %arg2[%c0_i32_48, %c0_i32_49] : memref<64x128xf32, #tpu.memory_space<any>> -> memref<1x128xf32, #tpu.memory_space<any>>
    %c0_i32_50 = arith.constant 0 : i32
    %c0_i32_51 = arith.constant 0 : i32
    %74 = tpu.memref_slice %arg3[%c0_i32_50, %c0_i32_51] : memref<8x128xf32, #tpu.memory_space<vmem>> -> memref<1x128xf32, #tpu.memory_space<vmem>>
    %75 = tpu.memref_slice %arg4[%c0_i32_47] : memref<8x!tpu.dma_semaphore, #tpu.memory_space<semaphore_mem>> -> memref<1x!tpu.dma_semaphore, #tpu.memory_space<semaphore_mem>>
    %76 = tpu.memref_squeeze %75 : memref<1x!tpu.dma_semaphore, #tpu.memory_space<semaphore_mem>> -> memref<!tpu.dma_semaphore, #tpu.memory_space<semaphore_mem>>
    tpu.wait_dma2 semaphore(%76 : memref<!tpu.dma_semaphore, #tpu.memory_space<semaphore_mem>>) src(%73 : memref<1x128xf32, #tpu.memory_space<any>>) dst(%74 : memref<1x128xf32, #tpu.memory_space<vmem>>)
    %c1_i32_52 = arith.constant 1 : i32
    %c0_i32_53 = arith.constant 0 : i32
    %c0_i32_54 = arith.constant 0 : i32
    %77 = tpu.memref_slice %arg2[%c0_i32_53, %c0_i32_54] : memref<64x128xf32, #tpu.memory_space<any>> -> memref<1x128xf32, #tpu.memory_space<any>>
    %c1_i32_55 = arith.constant 1 : i32
    %c0_i32_56 = arith.constant 0 : i32
    %78 = tpu.memref_slice %arg3[%c1_i32_55, %c0_i32_56] : memref<8x128xf32, #tpu.memory_space<vmem>> -> memref<1x128xf32, #tpu.memory_space<vmem>>
    %79 = tpu.memref_slice %arg4[%c1_i32_52] : memref<8x!tpu.dma_semaphore, #tpu.memory_space<semaphore_mem>> -> memref<1x!tpu.dma_semaphore, #tpu.memory_space<semaphore_mem>>
    %80 = tpu.memref_squeeze %79 : memref<1x!tpu.dma_semaphore, #tpu.memory_space<semaphore_mem>> -> memref<!tpu.dma_semaphore, #tpu.memory_space<semaphore_mem>>
    tpu.wait_dma2 semaphore(%80 : memref<!tpu.dma_semaphore, #tpu.memory_space<semaphore_mem>>) src(%77 : memref<1x128xf32, #tpu.memory_space<any>>) dst(%78 : memref<1x128xf32, #tpu.memory_space<vmem>>)
    %c2_i32_57 = arith.constant 2 : i32
    %c0_i32_58 = arith.constant 0 : i32
    %c0_i32_59 = arith.constant 0 : i32
    %81 = tpu.memref_slice %arg2[%c0_i32_58, %c0_i32_59] : memref<64x128xf32, #tpu.memory_space<any>> -> memref<1x128xf32, #tpu.memory_space<any>>
    %c2_i32_60 = arith.constant 2 : i32
    %c0_i32_61 = arith.constant 0 : i32
    %82 = tpu.memref_slice %arg3[%c2_i32_60, %c0_i32_61] : memref<8x128xf32, #tpu.memory_space<vmem>> -> memref<1x128xf32, #tpu.memory_space<vmem>>
    %83 = tpu.memref_slice %arg4[%c2_i32_57] : memref<8x!tpu.dma_semaphore, #tpu.memory_space<semaphore_mem>> -> memref<1x!tpu.dma_semaphore, #tpu.memory_space<semaphore_mem>>
    %84 = tpu.memref_squeeze %83 : memref<1x!tpu.dma_semaphore, #tpu.memory_space<semaphore_mem>> -> memref<!tpu.dma_semaphore, #tpu.memory_space<semaphore_mem>>
    tpu.wait_dma2 semaphore(%84 : memref<!tpu.dma_semaphore, #tpu.memory_space<semaphore_mem>>) src(%81 : memref<1x128xf32, #tpu.memory_space<any>>) dst(%82 : memref<1x128xf32, #tpu.memory_space<vmem>>)
    %c3_i32_62 = arith.constant 3 : i32
    %c0_i32_63 = arith.constant 0 : i32
    %c0_i32_64 = arith.constant 0 : i32
    %85 = tpu.memref_slice %arg2[%c0_i32_63, %c0_i32_64] : memref<64x128xf32, #tpu.memory_space<any>> -> memref<1x128xf32, #tpu.memory_space<any>>
    %c3_i32_65 = arith.constant 3 : i32
    %c0_i32_66 = arith.constant 0 : i32
    %86 = tpu.memref_slice %arg3[%c3_i32_65, %c0_i32_66] : memref<8x128xf32, #tpu.memory_space<vmem>> -> memref<1x128xf32, #tpu.memory_space<vmem>>
    %87 = tpu.memref_slice %arg4[%c3_i32_62] : memref<8x!tpu.dma_semaphore, #tpu.memory_space<semaphore_mem>> -> memref<1x!tpu.dma_semaphore, #tpu.memory_space<semaphore_mem>>
    %88 = tpu.memref_squeeze %87 : memref<1x!tpu.dma_semaphore, #tpu.memory_space<semaphore_mem>> -> memref<!tpu.dma_semaphore, #tpu.memory_space<semaphore_mem>>
    tpu.wait_dma2 semaphore(%88 : memref<!tpu.dma_semaphore, #tpu.memory_space<semaphore_mem>>) src(%85 : memref<1x128xf32, #tpu.memory_space<any>>) dst(%86 : memref<1x128xf32, #tpu.memory_space<vmem>>)
    %c4_i32_67 = arith.constant 4 : i32
    %c0_i32_68 = arith.constant 0 : i32
    %c0_i32_69 = arith.constant 0 : i32
    %89 = tpu.memref_slice %arg2[%c0_i32_68, %c0_i32_69] : memref<64x128xf32, #tpu.memory_space<any>> -> memref<1x128xf32, #tpu.memory_space<any>>
    %c4_i32_70 = arith.constant 4 : i32
    %c0_i32_71 = arith.constant 0 : i32
    %90 = tpu.memref_slice %arg3[%c4_i32_70, %c0_i32_71] : memref<8x128xf32, #tpu.memory_space<vmem>> -> memref<1x128xf32, #tpu.memory_space<vmem>>
    %91 = tpu.memref_slice %arg4[%c4_i32_67] : memref<8x!tpu.dma_semaphore, #tpu.memory_space<semaphore_mem>> -> memref<1x!tpu.dma_semaphore, #tpu.memory_space<semaphore_mem>>
    %92 = tpu.memref_squeeze %91 : memref<1x!tpu.dma_semaphore, #tpu.memory_space<semaphore_mem>> -> memref<!tpu.dma_semaphore, #tpu.memory_space<semaphore_mem>>
    tpu.wait_dma2 semaphore(%92 : memref<!tpu.dma_semaphore, #tpu.memory_space<semaphore_mem>>) src(%89 : memref<1x128xf32, #tpu.memory_space<any>>) dst(%90 : memref<1x128xf32, #tpu.memory_space<vmem>>)
    %c5_i32_72 = arith.constant 5 : i32
    %c0_i32_73 = arith.constant 0 : i32
    %c0_i32_74 = arith.constant 0 : i32
    %93 = tpu.memref_slice %arg2[%c0_i32_73, %c0_i32_74] : memref<64x128xf32, #tpu.memory_space<any>> -> memref<1x128xf32, #tpu.memory_space<any>>
    %c5_i32_75 = arith.constant 5 : i32
    %c0_i32_76 = arith.constant 0 : i32
    %94 = tpu.memref_slice %arg3[%c5_i32_75, %c0_i32_76] : memref<8x128xf32, #tpu.memory_space<vmem>> -> memref<1x128xf32, #tpu.memory_space<vmem>>
    %95 = tpu.memref_slice %arg4[%c5_i32_72] : memref<8x!tpu.dma_semaphore, #tpu.memory_space<semaphore_mem>> -> memref<1x!tpu.dma_semaphore, #tpu.memory_space<semaphore_mem>>
    %96 = tpu.memref_squeeze %95 : memref<1x!tpu.dma_semaphore, #tpu.memory_space<semaphore_mem>> -> memref<!tpu.dma_semaphore, #tpu.memory_space<semaphore_mem>>
    tpu.wait_dma2 semaphore(%96 : memref<!tpu.dma_semaphore, #tpu.memory_space<semaphore_mem>>) src(%93 : memref<1x128xf32, #tpu.memory_space<any>>) dst(%94 : memref<1x128xf32, #tpu.memory_space<vmem>>)
    %c6_i32_77 = arith.constant 6 : i32
    %c0_i32_78 = arith.constant 0 : i32
    %c0_i32_79 = arith.constant 0 : i32
    %97 = tpu.memref_slice %arg2[%c0_i32_78, %c0_i32_79] : memref<64x128xf32, #tpu.memory_space<any>> -> memref<1x128xf32, #tpu.memory_space<any>>
    %c6_i32_80 = arith.constant 6 : i32
    %c0_i32_81 = arith.constant 0 : i32
    %98 = tpu.memref_slice %arg3[%c6_i32_80, %c0_i32_81] : memref<8x128xf32, #tpu.memory_space<vmem>> -> memref<1x128xf32, #tpu.memory_space<vmem>>
    %99 = tpu.memref_slice %arg4[%c6_i32_77] : memref<8x!tpu.dma_semaphore, #tpu.memory_space<semaphore_mem>> -> memref<1x!tpu.dma_semaphore, #tpu.memory_space<semaphore_mem>>
    %100 = tpu.memref_squeeze %99 : memref<1x!tpu.dma_semaphore, #tpu.memory_space<semaphore_mem>> -> memref<!tpu.dma_semaphore, #tpu.memory_space<semaphore_mem>>
    tpu.wait_dma2 semaphore(%100 : memref<!tpu.dma_semaphore, #tpu.memory_space<semaphore_mem>>) src(%97 : memref<1x128xf32, #tpu.memory_space<any>>) dst(%98 : memref<1x128xf32, #tpu.memory_space<vmem>>)
    %c7_i32_82 = arith.constant 7 : i32
    %c0_i32_83 = arith.constant 0 : i32
    %c0_i32_84 = arith.constant 0 : i32
    %101 = tpu.memref_slice %arg2[%c0_i32_83, %c0_i32_84] : memref<64x128xf32, #tpu.memory_space<any>> -> memref<1x128xf32, #tpu.memory_space<any>>
    %c7_i32_85 = arith.constant 7 : i32
    %c0_i32_86 = arith.constant 0 : i32
    %102 = tpu.memref_slice %arg3[%c7_i32_85, %c0_i32_86] : memref<8x128xf32, #tpu.memory_space<vmem>> -> memref<1x128xf32, #tpu.memory_space<vmem>>
    %103 = tpu.memref_slice %arg4[%c7_i32_82] : memref<8x!tpu.dma_semaphore, #tpu.memory_space<semaphore_mem>> -> memref<1x!tpu.dma_semaphore, #tpu.memory_space<semaphore_mem>>
    %104 = tpu.memref_squeeze %103 : memref<1x!tpu.dma_semaphore, #tpu.memory_space<semaphore_mem>> -> memref<!tpu.dma_semaphore, #tpu.memory_space<semaphore_mem>>
    tpu.wait_dma2 semaphore(%104 : memref<!tpu.dma_semaphore, #tpu.memory_space<semaphore_mem>>) src(%101 : memref<1x128xf32, #tpu.memory_space<any>>) dst(%102 : memref<1x128xf32, #tpu.memory_space<vmem>>)
    return
  }
  func.func @transform_1(%arg0: i32, %arg1: memref<16xi32, #tpu.memory_space<smem>>) -> (i32, i32) {
    %c0_i32 = arith.constant 0 : i32
    %c0_i32_0 = arith.constant 0 : i32
    return %arg0, %c0_i32 : i32, i32
  }
}

</mosaic_0001>

<llo_original>
// kernel: tpu_custom_call.1
$region0: #{tpu_custom_call.1}
  #allocation0 [shape = 'u32[]', space=smem, size = 0x4, offset = 0x4, fixed_abs, tag = 'smem constant byte address 0x4 - core index']
  #allocation1 [shape = 'u32[144,128]{1,0:T(1,128)}', space=vmem, size = 0x12000, scoped, tag = 'internal scratch']
  #allocation2 [shape = 's32[8]{0}', space=sflag, size = 0x20, scoped, tag = 'scratch operand']
  #allocation3 [shape = 's32[1]{0}', space=sflag, size = 0x4, scoped, tag = 'scoped memory for tpu_custom_call.1']
  #allocation4 [shape = 'u8[512]{0}', space=smem, size = 0x200, scoped, tag = 'prefetched SMEM operand 0']
  #allocation7 [shape = 's32[]', space=sflag, size = 0x4, offset = 0, fixed_abs, tag = 'sflag constant byte address 0x0 - dummy sync flag']
  #allocation8 [shape = 's32[]', space=sflag, size = 0x4, offset = 0, fixed_abs, tag = 'sflag constant byte address 0x0 - dummy sync flag']
  #allocation9 [shape = 'u32[]', space=smem, size = 0x4, offset = 0x44, fixed_abs, tag = 'smem constant byte address 0x44 - assertion arg 0']
  #allocation10 [shape = 'u32[]', space=smem, size = 0x4, offset = 0x48, fixed_abs, tag = 'smem constant byte address 0x48 - assertion arg 1']
  #allocation11 [shape = 's32[]', space=sflag, size = 0x4, offset = 0, fixed_abs, tag = 'sflag constant byte address 0x0 - dummy sync flag']
  #allocation12 [shape = 's32[]', space=sflag, size = 0x4, offset = 0, fixed_abs, tag = 'sflag constant byte address 0x0 - dummy sync flag']
  #allocation13 [shape = 's32[]', space=sflag, size = 0x4, offset = 0, fixed_abs, tag = 'sflag constant byte address 0x0 - dummy sync flag']
  #allocation14 [shape = 's32[]', space=sflag, size = 0x4, offset = 0, fixed_abs, tag = 'sflag constant byte address 0x0 - dummy sync flag']
  #allocation15 [shape = 's32[]', space=sflag, size = 0x4, offset = 0, fixed_abs, tag = 'sflag constant byte address 0x0 - dummy sync flag']
  #allocation16 [shape = 's32[]', space=sflag, size = 0x4, offset = 0, fixed_abs, tag = 'sflag constant byte address 0x0 - dummy sync flag']
  #allocation17 [shape = 's32[]', space=sflag, size = 0x4, offset = 0, fixed_abs, tag = 'sflag constant byte address 0x0 - dummy sync flag']
  #allocation18 [shape = 's32[]', space=sflag, size = 0x4, offset = 0, fixed_abs, tag = 'sflag constant byte address 0x0 - dummy sync flag']
  #allocation19 [shape = 's32[]', space=sflag, size = 0x4, offset = 0, fixed_abs, tag = 'sflag constant byte address 0x0 - dummy sync flag']
  #allocation20 [shape = 's32[]', space=sflag, size = 0x4, offset = 0, fixed_abs, tag = 'sflag constant byte address 0x0 - dummy sync flag']
  #allocation21 [shape = 's32[]', space=sflag, size = 0x4, offset = 0, fixed_abs, tag = 'sflag constant byte address 0x0 - dummy sync flag']
  #allocation22 [shape = 's32[]', space=sflag, size = 0x4, offset = 0, fixed_abs, tag = 'sflag constant byte address 0x0 - dummy sync flag']
  #allocation23 [shape = 's32[]', space=sflag, size = 0x4, offset = 0, fixed_abs, tag = 'sflag constant byte address 0x0 - dummy sync flag']
  #allocation24 [shape = 's32[]', space=sflag, size = 0x4, offset = 0, fixed_abs, tag = 'sflag constant byte address 0x0 - dummy sync flag']
  %s0 = inlined_call_operand.hbm [shape: s32[16], index: 0, kind: input, shape index: {}]
  %s1 = inlined_call_operand.hbm [shape: f32[64,128], index: 1, kind: input, shape index: {}]
  %s2 = inlined_call_operand.hbm [shape: f32[16,128], index: 2, kind: output, shape index: {}]
  %s3 = sld [smem:[#allocation0]]
  $region57: #{tpu_custom_call.1} parent=0
    _
  %s5 = ssub.s32 1, %s3
  %s6 = scalar_select 0, %s5, %s3
  %8 = dma.hbm_to_smem %s0, 16, [#allocation4], [#allocation3]
  %9 = dma.done [#allocation3], 16
  %10 = sfence
  $region1: #{tpu_custom_call.1} parent=0
    #allocation5 [shape = 'u8[8192]{0}', space=vmem, size = 0x2000, scoped, tag = 'output window, operand 0']
    #allocation6 [shape = 's32[2]{0}', space=sflag, size = 0x8, scoped, tag = 'scoped memory for tpu_custom_call.1']
    %11 = vsyncpa [#allocation6], 0
    %s12 = scalar_lea.sflag [#allocation6], 1
    %13 = vsyncpa %s12, 0
    loop: start=0, step=1, limit=3
    $region2: #{tpu_custom_call.1} parent=1 // loop_pre_header
      _
    $region3: #{tpu_custom_call.1} parent=1 // loop_header
      %s15 = sphi 0, %s19
      %p16 = scmp.ge.s32.totalorder %s15, 3
      %s24 = sphi 0, %s26
      %s27 = sphi 0, %s24
      %s37 = sphi 0, %s27
    $region4: #{tpu_custom_call.1} parent=1 // loop_header_branch
      %18 = sbr.rel (%p16) target = $region8
    $region5: #{tpu_custom_call.1} parent=1 // loop_body
      %s20 = ssub.s32 %s15, 1
      %s21 = sadd.s32 %s15, 1
      %s22 = ssub.s32 %s15, %s21
      %p23 = scmp.eq.s32.totalorder %s22, 0
      %s25 = sadd.s32 %s24, 1
      %s26 = scalar_select %p23, %s24, %s25
      %p28 = pneg %p23
      %p29 = scmp.eq.s32.totalorder %s15, 1
      %p30 = por %p28, %p29
      %p31 = scmp.ne.s32.totalorder %s24, %s27
      %p32 = scmp.eq.s32.totalorder %s15, 0
      %p33 = por %p31, %p32
      %p34 = scmp.ne.s32.totalorder %s24, %s27
      %p35 = scmp.eq.s32.totalorder %s20, 1
      %p36 = por %p34, %p35
      %p38 = scmp.ne.s32.totalorder %s27, %s37
      %p39 = scmp.eq.s32.totalorder %s20, 0
      %p40 = por %p38, %p39
      %p41 = scmp.lt.s32.totalorder %s15, 2
      // Predicated region
      $region9: #{tpu_custom_call.1} parent=5 // pred_check
        %p42 = pneg %p41
      $region10: #{tpu_custom_call.1} parent=5 // pred_check_branch
        %44 = sbr.rel (%p42) target = $region12
      $region11: #{tpu_custom_call.1} parent=5 // pred_region
        %p45 = pneg %p33
        %p46 = pneg %p30
        %s47 = sand.u32 %s24, 1
        %s48 = scalar_lea.sflag [#allocation6], %s47
        %s49 = sand.u32 %s24, 1
        %s50 = smul.addr %s49, 8
        %s51 = scalar_lea.vmem [#allocation5], %s50
        %s52 = smul.u32 %s15, 8
        %s53 = sld [smem:[#allocation4 + %s52]]
        %p54 = scmp.gt.s32.totalorder %s53, 0
        %s55 = scalar_select %p54, %s53, 0
        %p56 = scmp.lt.s32.totalorder %s55, 63
        %s57 = scalar_select %p56, %s55, 63
        %s58 = smul.addr %s57, 16
        %s59 = scalar_lea.hbm %s1, %s58
        // Predicated region
        $region13: #{tpu_custom_call.1} parent=11 // pred_check
          _
        $region14: #{tpu_custom_call.1} parent=11 // pred_check_branch
          %61 = sbr.rel target = $region16
        $region15: #{tpu_custom_call.1} parent=11 // pred_region
          %62 = sst [smem:[#allocation9]] [#allocation8]
          %63 = sst [smem:[#allocation10]] [#allocation7]
        $region16: #{tpu_custom_call.1} parent=11 // pred_fallthru
          _
        %65 = shalt.err (0)
        %s67 = sshll.u32 %s51, 4
        %s68 = int_to_ptr.vmem [resolvable:$true] %s67
        %70 = dma.hbm_to_vmem [thread:$0]  %s59, 16, %s68, [#allocation2]
        %s71 = sadd.s32 %s52, 1
        %s72 = sld [smem:[#allocation4 + %s71]]
        %p73 = scmp.gt.s32.totalorder %s72, 0
        %s74 = scalar_select %p73, %s72, 0
        %p75 = scmp.lt.s32.totalorder %s74, 63
        %s76 = scalar_select %p75, %s74, 63
        %s77 = smul.addr %s76, 16
        %s78 = scalar_lea.hbm %s1, %s77
        %s79 = scalar_lea.vmem %s51, 1 [#allocation5]
        %s80 = scalar_lea.sflag [#allocation2], 1
        // Predicated region
        $region17: #{tpu_custom_call.1} parent=11 // pred_check
          _
        $region18: #{tpu_custom_call.1} parent=11 // pred_check_branch
          %82 = sbr.rel target = $region20
        $region19: #{tpu_custom_call.1} parent=11 // pred_region
          %83 = sst [smem:[#allocation9]] [#allocation12]
          %84 = sst [smem:[#allocation10]] [#allocation11]
        $region20: #{tpu_custom_call.1} parent=11 // pred_fallthru
          _
        %86 = shalt.err (0)
        %s88 = sshll.u32 %s79, 4
        %s89 = int_to_ptr.vmem [resolvable:$true] %s88
        %91 = dma.hbm_to_vmem [thread:$0]  %s78, 16, %s89, %s80
        %s92 = sadd.s32 %s52, 2
        %s93 = sld [smem:[#allocation4 + %s92]]
        %p94 = scmp.gt.s32.totalorder %s93, 0
        %s95 = scalar_select %p94, %s93, 0
        %p96 = scmp.lt.s32.totalorder %s95, 63
        %s97 = scalar_select %p96, %s95, 63
        %s98 = smul.addr %s97, 16
        %s99 = scalar_lea.hbm %s1, %s98
        %s100 = scalar_lea.vmem %s51, 2 [#allocation5]
        %s101 = scalar_lea.sflag [#allocation2], 2
        // Predicated region
        $region21: #{tpu_custom_call.1} parent=11 // pred_check
          _
        $region22: #{tpu_custom_call.1} parent=11 // pred_check_branch
          %103 = sbr.rel target = $region24
        $region23: #{tpu_custom_call.1} parent=11 // pred_region
          %104 = sst [smem:[#allocation9]] [#allocation14]
          %105 = sst [smem:[#allocation10]] [#allocation13]
        $region24: #{tpu_custom_call.1} parent=11 // pred_fallthru
          _
        %107 = shalt.err (0)
        %s109 = sshll.u32 %s100, 4
        %s110 = int_to_ptr.vmem [resolvable:$true] %s109
        %112 = dma.hbm_to_vmem [thread:$0]  %s99, 16, %s110, %s101
        %s113 = sadd.s32 %s52, 3
        %s114 = sld [smem:[#allocation4 + %s113]]
        %p115 = scmp.gt.s32.totalorder %s114, 0
        %s116 = scalar_select %p115, %s114, 0
        %p117 = scmp.lt.s32.totalorder %s116, 63
        %s118 = scalar_select %p117, %s116, 63
        %s119 = smul.addr %s118, 16
        %s120 = scalar_lea.hbm %s1, %s119
        %s121 = scalar_lea.vmem %s51, 3 [#allocation5]
        %s122 = scalar_lea.sflag [#allocation2], 3
        // Predicated region
        $region25: #{tpu_custom_call.1} parent=11 // pred_check
          _
        $region26: #{tpu_custom_call.1} parent=11 // pred_check_branch
          %124 = sbr.rel target = $region28
        $region27: #{tpu_custom_call.1} parent=11 // pred_region
          %125 = sst [smem:[#allocation9]] [#allocation16]
          %126 = sst [smem:[#allocation10]] [#allocation15]
        $region28: #{tpu_custom_call.1} parent=11 // pred_fallthru
          _
        %128 = shalt.err (0)
        %s130 = sshll.u32 %s121, 4
        %s131 = int_to_ptr.vmem [resolvable:$true] %s130
        %133 = dma.hbm_to_vmem [thread:$0]  %s120, 16, %s131, %s122
        %s134 = sadd.s32 %s52, 4
        %s135 = sld [smem:[#allocation4 + %s134]]
        %p136 = scmp.gt.s32.totalorder %s135, 0
        %s137 = scalar_select %p136, %s135, 0
        %p138 = scmp.lt.s32.totalorder %s137, 63
        %s139 = scalar_select %p138, %s137, 63
        %s140 = smul.addr %s139, 16
        %s141 = scalar_lea.hbm %s1, %s140
        %s142 = scalar_lea.vmem %s51, 4 [#allocation5]
        %s143 = scalar_lea.sflag [#allocation2], 4
        // Predicated region
        $region29: #{tpu_custom_call.1} parent=11 // pred_check
          _
        $region30: #{tpu_custom_call.1} parent=11 // pred_check_branch
          %145 = sbr.rel target = $region32
        $region31: #{tpu_custom_call.1} parent=11 // pred_region
          %146 = sst [smem:[#allocation9]] [#allocation18]
          %147 = sst [smem:[#allocation10]] [#allocation17]
        $region32: #{tpu_custom_call.1} parent=11 // pred_fallthru
          _
        %149 = shalt.err (0)
        %s151 = sshll.u32 %s142, 4
        %s152 = int_to_ptr.vmem [resolvable:$true] %s151
        %154 = dma.hbm_to_vmem [thread:$0]  %s141, 16, %s152, %s143
        %s155 = sadd.s32 %s52, 5
        %s156 = sld [smem:[#allocation4 + %s155]]
        %p157 = scmp.gt.s32.totalorder %s156, 0
        %s158 = scalar_select %p157, %s156, 0
        %p159 = scmp.lt.s32.totalorder %s158, 63
        %s160 = scalar_select %p159, %s158, 63
        %s161 = smul.addr %s160, 16
        %s162 = scalar_lea.hbm %s1, %s161
        %s163 = scalar_lea.vmem %s51, 5 [#allocation5]
        %s164 = scalar_lea.sflag [#allocation2], 5
        // Predicated region
        $region33: #{tpu_custom_call.1} parent=11 // pred_check
          _
        $region34: #{tpu_custom_call.1} parent=11 // pred_check_branch
          %166 = sbr.rel target = $region36
        $region35: #{tpu_custom_call.1} parent=11 // pred_region
          %167 = sst [smem:[#allocation9]] [#allocation20]
          %168 = sst [smem:[#allocation10]] [#allocation19]
        $region36: #{tpu_custom_call.1} parent=11 // pred_fallthru
          _
        %170 = shalt.err (0)
        %s172 = sshll.u32 %s163, 4
        %s173 = int_to_ptr.vmem [resolvable:$true] %s172
        %175 = dma.hbm_to_vmem [thread:$0]  %s162, 16, %s173, %s164
        %s176 = sadd.s32 %s52, 6
        %s177 = sld [smem:[#allocation4 + %s176]]
        %p178 = scmp.gt.s32.totalorder %s177, 0
        %s179 = scalar_select %p178, %s177, 0
        %p180 = scmp.lt.s32.totalorder %s179, 63
        %s181 = scalar_select %p180, %s179, 63
        %s182 = smul.addr %s181, 16
        %s183 = scalar_lea.hbm %s1, %s182
        %s184 = scalar_lea.vmem %s51, 6 [#allocation5]
        %s185 = scalar_lea.sflag [#allocation2], 6
        // Predicated region
        $region37: #{tpu_custom_call.1} parent=11 // pred_check
          _
        $region38: #{tpu_custom_call.1} parent=11 // pred_check_branch
          %187 = sbr.rel target = $region40
        $region39: #{tpu_custom_call.1} parent=11 // pred_region
          %188 = sst [smem:[#allocation9]] [#allocation22]
          %189 = sst [smem:[#allocation10]] [#allocation21]
        $region40: #{tpu_custom_call.1} parent=11 // pred_fallthru
          _
        %191 = shalt.err (0)
        %s193 = sshll.u32 %s184, 4
        %s194 = int_to_ptr.vmem [resolvable:$true] %s193
        %196 = dma.hbm_to_vmem [thread:$0]  %s183, 16, %s194, %s185
        %s197 = sadd.s32 %s52, 7
        %s198 = sld [smem:[#allocation4 + %s197]]
        %p199 = scmp.gt.s32.totalorder %s198, 0
        %s200 = scalar_select %p199, %s198, 0
        %p201 = scmp.lt.s32.totalorder %s200, 63
        %s202 = scalar_select %p201, %s200, 63
        %s203 = smul.addr %s202, 16
        %s204 = scalar_lea.hbm %s1, %s203
        %s205 = scalar_lea.vmem %s51, 7 [#allocation5]
        %s206 = scalar_lea.sflag [#allocation2], 7
        // Predicated region
        $region41: #{tpu_custom_call.1} parent=11 // pred_check
          _
        $region42: #{tpu_custom_call.1} parent=11 // pred_check_branch
          %208 = sbr.rel target = $region44
        $region43: #{tpu_custom_call.1} parent=11 // pred_region
          %209 = sst [smem:[#allocation9]] [#allocation24]
          %210 = sst [smem:[#allocation10]] [#allocation23]
        $region44: #{tpu_custom_call.1} parent=11 // pred_fallthru
          _
        %212 = shalt.err (0)
        %s214 = sshll.u32 %s205, 4
        %s215 = int_to_ptr.vmem [resolvable:$true] %s214
        %217 = dma.hbm_to_vmem [thread:$0]  %s204, 16, %s215, %s206
        %s218 = smul.u32 1, 1
        %s219 = sshll.u32 %s218, 4
        %220 = dma.done [#allocation2], %s219
        %s221 = sshll.u32 %s218, 4
        %222 = dma.done %s80, %s221
        %s223 = sshll.u32 %s218, 4
        %224 = dma.done %s101, %s223
        %s225 = sshll.u32 %s218, 4
        %226 = dma.done %s122, %s225
        %s227 = sshll.u32 %s218, 4
        %228 = dma.done %s143, %s227
        %s229 = sshll.u32 %s218, 4
        %230 = dma.done %s164, %s229
        %s231 = sshll.u32 %s218, 4
        %232 = dma.done %s185, %s231
        %s233 = sshll.u32 %s218, 4
        %234 = dma.done %s206, %s233
        %s235 = sand.u32 %s24, 1
        %s236 = scalar_lea.sflag [#allocation6], %s235
        %s237 = sand.u32 %s24, 1
        %s238 = smul.addr %s237, 8
        %s239 = scalar_lea.vmem [#allocation5], %s238
        // Predicated region
        $region45: #{tpu_custom_call.1} parent=11 // pred_check
          %p240 = pneg %p30
        $region46: #{tpu_custom_call.1} parent=11 // pred_check_branch
          %242 = sbr.rel (%p240) target = $region48
        $region47: #{tpu_custom_call.1} parent=11 // pred_region
          %s244 = ssub.s32 128, 128
          %245 = vsyncadd %s236, %s244
          %s246 = smul.addr %s15, 128
          %s247 = scalar_lea.hbm %s2, %s246
          %s249 = sshll.u32 %s239, 4
          %s250 = int_to_ptr.vmem [resolvable:$true] %s249
          %252 = dma.vmem_to_hbm [thread:$0]  %s250, 128, %s247, %s236
        $region48: #{tpu_custom_call.1} parent=11 // pred_fallthru
          _
      $region12: #{tpu_custom_call.1} parent=5 // pred_fallthru
        _
      %p253 = scmp.le.s32.totalorder 1, %s15
      // Predicated region
      $region49: #{tpu_custom_call.1} parent=5 // pred_check
        %p254 = pneg %p253
      $region50: #{tpu_custom_call.1} parent=5 // pred_check_branch
        %256 = sbr.rel (%p254) target = $region52
      $region51: #{tpu_custom_call.1} parent=5 // pred_region
        %s257 = ssub.s32 %s15, 1
        // Predicated region
        $region53: #{tpu_custom_call.1} parent=51 // pred_check
          %p258 = pneg %p36
        $region54: #{tpu_custom_call.1} parent=51 // pred_check_branch
          %260 = sbr.rel (%p258) target = $region56
        $region55: #{tpu_custom_call.1} parent=51 // pred_region
          %s261 = sand.u32 %s27, 1
          %s262 = scalar_lea.sflag [#allocation6], %s261
          %s263 = sand.u32 %s27, 1
          %s264 = smul.addr %s263, 8
          %s265 = scalar_lea.vmem [#allocation5], %s264
          %266 = dma.done %s262, 128
        $region56: #{tpu_custom_call.1} parent=51 // pred_fallthru
          _
      $region52: #{tpu_custom_call.1} parent=5 // pred_fallthru
        _
    $region6: #{tpu_custom_call.1} parent=1 // loop_footer
      %s19 = sadd.s32 1, %s15
    $region7: #{tpu_custom_call.1} parent=1 // loop_footer_branch
      %14 = sbr.rel target = $region3
    $region8: #{tpu_custom_call.1} parent=1 // loop_exit
      _
    %267 = vsyncpa [#allocation6], 1
    %s268 = scalar_lea.sflag [#allocation6], 1
    %269 = vsyncpa %s268, 1
  %270 = vsyncmov [#allocation2]
  %s271 = vpop.sfrf %270
  %p272 = scmp.eq.s32.totalorder %s271, 0
  %p273 = pneg %p272
  %275 = shalt.err (%p273)
  %s276 = scalar_lea.sflag [#allocation2], 1
  %277 = vsyncmov %s276
  %s278 = vpop.sfrf %277
  %p279 = scmp.eq.s32.totalorder %s278, 0
  %p280 = pneg %p279
  %282 = shalt.err (%p280)
  %s283 = scalar_lea.sflag [#allocation2], 2
  %284 = vsyncmov %s283
  %s285 = vpop.sfrf %284
  %p286 = scmp.eq.s32.totalorder %s285, 0
  %p287 = pneg %p286
  %289 = shalt.err (%p287)
  %s290 = scalar_lea.sflag [#allocation2], 3
  %291 = vsyncmov %s290
  %s292 = vpop.sfrf %291
  %p293 = scmp.eq.s32.totalorder %s292, 0
  %p294 = pneg %p293
  %296 = shalt.err (%p294)
  %s297 = scalar_lea.sflag [#allocation2], 4
  %298 = vsyncmov %s297
  %s299 = vpop.sfrf %298
  %p300 = scmp.eq.s32.totalorder %s299, 0
  %p301 = pneg %p300
  %303 = shalt.err (%p301)
  %s304 = scalar_lea.sflag [#allocation2], 5
  %305 = vsyncmov %s304
  %s306 = vpop.sfrf %305
  %p307 = scmp.eq.s32.totalorder %s306, 0
  %p308 = pneg %p307
  %310 = shalt.err (%p308)
  %s311 = scalar_lea.sflag [#allocation2], 6
  %312 = vsyncmov %s311
  %s313 = vpop.sfrf %312
  %p314 = scmp.eq.s32.totalorder %s313, 0
  %p315 = pneg %p314
  %317 = shalt.err (%p315)
  %s318 = scalar_lea.sflag [#allocation2], 7
  %319 = vsyncmov %s318
  %s320 = vpop.sfrf %319
  %p321 = scmp.eq.s32.totalorder %s320, 0
  %p322 = pneg %p321
  %324 = shalt.err (%p322)

</llo_original>
